<compile_context>
chip_gen: v7x
topology: tpu7x:2x2x1
jax: 0.10.0
libtpu: 0.0.40
codegen_flags: <defaults>
</compile_context>

<pallas_src>
import math

import jax
import jax.numpy as jnp
from jax.experimental import pallas as pl
from jax.experimental.pallas import tpu as pltpu


def _round_up(x, m):
    return (x + m - 1) // m * m


def _relu(v):
    return jnp.maximum(v, 0.0)


def _pad2d(arr, rows, cols, dtype):
    arr = arr.astype(dtype)
    r, c = arr.shape
    if r == rows and c == cols:
        return arr
    return jnp.pad(arr, ((0, rows - r), (0, cols - c)))


def _vmem_limit(nbytes):
    # Generous headroom for double buffering, but stay well under v7x's
    # 64 MiB physical VMEM per TensorCore; never request less than 16 MiB.
    return int(min(max(2 * nbytes + (8 << 20), 16 << 20), 48 << 20))


# ----------------------------------------------------------------------------
# Tiled matmul kernel: out = act(a @ b (+ bias)), f32 accumulation.
# Grid = (M // tm, K // tk); output block stays resident across the k axis.
# ----------------------------------------------------------------------------
def _make_kernel(use_bias, activation):
    def body(a_ref, b_ref, bias_ref, o_ref, acc_ref):
        k = pl.program_id(1)

        @pl.when(k == 0)
        def _():
            acc_ref[...] = jnp.zeros_like(acc_ref)

        acc_ref[...] += jnp.dot(a_ref[...], b_ref[...],
                                preferred_element_type=jnp.float32)

        @pl.when(k == pl.num_programs(1) - 1)
        def _():
            out = acc_ref[...]
            if use_bias:
                out = out + bias_ref[...].astype(jnp.float32)
            if activation is not None:
                out = activation(out)
            o_ref[...] = out.astype(o_ref.dtype)

    if use_bias:
        def kernel(a_ref, b_ref, bias_ref, o_ref, acc_ref):
            body(a_ref, b_ref, bias_ref, o_ref, acc_ref)
    else:
        def kernel(a_ref, b_ref, o_ref, acc_ref):
            body(a_ref, b_ref, None, o_ref, acc_ref)
    return kernel


def _matmul_bias_act(a, b, bias, *, use_bias, activation, out_dtype, tm, tk):
    """out = act(a @ b (+ bias)). a:(M,K), b:(K,N). Caller guarantees
    M % tm == 0, K % tk == 0, N a multiple of 128 (kept full-width)."""
    M, K = a.shape
    _, N = b.shape

    in_specs = [pl.BlockSpec((tm, tk), lambda i, k: (i, k)),
                pl.BlockSpec((tk, N), lambda i, k: (k, 0))]
    args = [a, b]
    if use_bias:
        in_specs.append(pl.BlockSpec((1, N), lambda i, k: (0, 0)))
        args.append(bias)

    itm = jnp.dtype(a.dtype).itemsize
    ito = jnp.dtype(out_dtype).itemsize
    vmem_needed = (2 * tm * tk * itm        # a tiles, double-buffered
                   + 2 * tk * N * itm       # b tiles, double-buffered
                   + 2 * tm * N * ito       # output tiles
                   + tm * N * 4             # f32 accumulator
                   + 2 * N * 4)             # bias
    cost = pl.CostEstimate(
        flops=2 * M * K * N,
        transcendentals=0,
        bytes_accessed=int(M * K * itm + (M // tm) * K * N * itm
                           + M * N * ito))

    return pl.pallas_call(
        _make_kernel(use_bias, activation),
        out_shape=jax.ShapeDtypeStruct((M, N), out_dtype),
        grid_spec=pltpu.PrefetchScalarGridSpec(
            num_scalar_prefetch=0,
            grid=(M // tm, K // tk),
            in_specs=in_specs,
            out_specs=pl.BlockSpec((tm, N), lambda i, k: (i, 0)),
            scratch_shapes=[pltpu.VMEM((tm, N), jnp.float32)],
        ),
        compiler_params=pltpu.CompilerParams(
            # Row axis splits across TensorCores (v7x megacore); k is the
            # reduction axis -> "arbitrary" and last in the grid.
            dimension_semantics=("parallel", "arbitrary"),
            vmem_limit_bytes=_vmem_limit(vmem_needed)),
        cost_estimate=cost,
    )(*args)


# ----------------------------------------------------------------------------
# Public wrapper: GCN forward.
# ----------------------------------------------------------------------------
def graph_convolution(g, x, weight, bias=None, *, use_bias=True,
                      activation=_relu, compute_dtype=None,
                      tile_m=256, tile_k=256):
    """out = activation(g @ (x @ W) + bias), dropout == identity.

    compute_dtype: dtype fed to the MXU (e.g. jnp.bfloat16 on v6e/v7x);
    accumulation, bias add and activation are always float32.
    """
    N = g.shape[0]
    Din, Dout = weight.shape
    out_dtype = x.dtype
    cdt = jnp.dtype(compute_dtype) if compute_dtype is not None else jnp.dtype(x.dtype)

    # Lane-aligned feature dims, tile-aligned node dim.
    Dinp = _round_up(Din, 128)
    Doutp = _round_up(Dout, 128)
    N128 = _round_up(N, 128)
    tm = min(tile_m, N128)
    tk = min(tile_k, N128)
    Np = _round_up(N, tm * tk // math.gcd(tm, tk))

    # Reduction-tile size for the small feature-dim matmuls: a 128-multiple
    # that divides the padded feature dim.
    tk_din = math.gcd(Dinp, tk)

    g_p = _pad2d(g, Np, Np, cdt)
    x_p = _pad2d(x, Np, Dinp, cdt)
    w_p = _pad2d(weight, Dinp, Doutp, cdt)
    bias_p = (_pad2d(bias.reshape(1, Dout), 1, Doutp, jnp.float32)
              if use_bias else None)

    if Dout <= Din:
        # support = x @ W (cheap, computed once), then the big tiled
        # g @ support with the fused bias/activation epilogue.
        support = _matmul_bias_act(x_p, w_p, None, use_bias=False,
                                   activation=None, out_dtype=cdt,
                                   tm=tm, tk=tk_din)
        out_p = _matmul_bias_act(g_p, support, bias_p, use_bias=use_bias,
                                 activation=activation, out_dtype=out_dtype,
                                 tm=tm, tk=tk)
    else:
        # Cheaper association: t = g @ x (big tiled matmul), then t @ W with
        # the fused epilogue.
        t = _matmul_bias_act(g_p, x_p, None, use_bias=False, activation=None,
                             out_dtype=cdt, tm=tm, tk=tk)
        out_p = _matmul_bias_act(t, w_p, bias_p, use_bias=use_bias,
                                 activation=activation, out_dtype=out_dtype,
                                 tm=tm, tk=tk_din)

    return out_p[:N, :Dout]


if __name__ == "__main__":
    key = jax.random.PRNGKey(0)
    k_g, k_x, k_w, k_w2 = jax.random.split(key, 4)

    N, Din, Dout = 256, 32, 32

    # Adjacency: symmetric, row-normalized dense matrix.
    a = jax.random.uniform(k_g, (N, N), dtype=jnp.float32)
    g = (a + a.T) * 0.5
    g = g / jnp.sum(g, axis=1, keepdims=True)

    x = jax.random.normal(k_x, (N, Din), dtype=jnp.float32)

    # Xavier normal init: std = sqrt(2 / (fan_in + fan_out)); bias zeros.
    std = (2.0 / (Din + Dout)) ** 0.5
    w = std * jax.random.normal(k_w, (Din, Dout), dtype=jnp.float32)
    b = jnp.zeros((Dout,), dtype=jnp.float32)

    relu = lambda v: jnp.maximum(v, 0.0)
    ref = jnp.maximum(g @ (x @ w) + b, 0.0)

    # 1) f32 path, small tiles -> (2, 2) grid exercises accumulator/epilogue.
    out = jax.block_until_ready(
        graph_convolution(g, x, w, b, use_bias=True, activation=relu,
                          tile_m=128, tile_k=128))
    assert out.shape == (N, Dout)
    assert jnp.allclose(out, ref, atol=5e-3, rtol=5e-3), "f32 path mismatch"

    # 2) bf16 MXU inputs with f32 accumulation (v6e/v7x fast path).
    out_bf16 = jax.block_until_ready(
        graph_convolution(g, x, w, b, use_bias=True, activation=relu,
                          compute_dtype=jnp.bfloat16))
    assert jnp.allclose(out_bf16, ref, atol=5e-2, rtol=5e-2), "bf16 path mismatch"

    # 3) use_bias=False and Dout > Din -> exercises the (g @ x) @ W association.
    Dout2 = 96
    std2 = (2.0 / (Din + Dout2)) ** 0.5
    w2 = std2 * jax.random.normal(k_w2, (Din, Dout2), dtype=jnp.float32)
    out2 = jax.block_until_ready(
        graph_convolution(g, x, w2, None, use_bias=False, activation=relu))
    ref2 = jnp.maximum(g @ (x @ w2), 0.0)
    assert out2.shape == (N, Dout2)
    assert jnp.allclose(out2, ref2, atol=5e-3, rtol=5e-3), "no-bias path mismatch"

    print("KERNEL_OK")
</pallas_src>

<mosaic_0001>
module attributes {stable_mosaic.version = 11 : i64} {
  func.func @kernel(%arg0: i32, %arg1: i32, %arg2: memref<128x128xf32, #tpu.memory_space<vmem>>, %arg3: memref<128x128xf32, #tpu.memory_space<vmem>>, %arg4: memref<128x128xf32, #tpu.memory_space<vmem>>, %arg5: memref<128x128xf32, #tpu.memory_space<vmem>>) attributes {dimension_semantics = [#tpu.dimension_semantics<parallel>, #tpu.dimension_semantics<arbitrary>], iteration_bounds = array<i64: 2, 1>, scalar_prefetch = 0 : i64, scratch_operands = 1 : i64, tpu.core_type = #tpu.core_type<tc>, window_params = [{transform_indices = @transform_0, window_bounds = array<i64: 128, 128>}, {transform_indices = @transform_1, window_bounds = array<i64: 128, 128>}, {transform_indices = @transform_2, window_bounds = array<i64: 128, 128>}]} {
    %c0_i32 = arith.constant 0 : i32
    %0 = arith.cmpi eq, %arg1, %c0_i32 : i32
    %1 = arith.extui %0 : i1 to i32
    %c0_i32_0 = arith.constant 0 : i32
    %2 = arith.cmpi ne, %1, %c0_i32_0 : i32
    scf.if %2 {
      %cst_10 = arith.constant 0.000000e+00 : f32
      %12 = vector.broadcast %cst_10 : f32 to vector<128x128xf32>
      %c0_11 = arith.constant 0 : index
      %c0_12 = arith.constant 0 : index
      %13 = vector.load %arg5[%c0_11, %c0_12] : memref<128x128xf32, #tpu.memory_space<vmem>>, vector<128x128xf32>
      tpu.vector_store %arg5[%c0_11, %c0_12], %12 {strides = array<i32>} : memref<128x128xf32, #tpu.memory_space<vmem>>, vector<128x128xf32>,
    } else {
    }
    %c0 = arith.constant 0 : index
    %c0_1 = arith.constant 0 : index
    %3 = vector.load %arg5[%c0, %c0_1] : memref<128x128xf32, #tpu.memory_space<vmem>>, vector<128x128xf32>
    %c0_2 = arith.constant 0 : index
    %c0_3 = arith.constant 0 : index
    %4 = vector.load %arg2[%c0_2, %c0_3] : memref<128x128xf32, #tpu.memory_space<vmem>>, vector<128x128xf32>
    %c0_4 = arith.constant 0 : index
    %c0_5 = arith.constant 0 : index
    %5 = vector.load %arg3[%c0_4, %c0_5] : memref<128x128xf32, #tpu.memory_space<vmem>>, vector<128x128xf32>
    %cst = arith.constant dense<0.000000e+00> : vector<128x128xf32>
    %6 = tpu.matmul %4, %5, %cst {dimension_numbers = #tpu.dot_dimension_numbers<[1], [0], [0], [1], [0, 0, 1, 1], [], []>} : vector<128x128xf32>, vector<128x128xf32>, vector<128x128xf32> -> vector<128x128xf32>
    %7 = arith.addf %3, %6 : vector<128x128xf32>
    %c0_6 = arith.constant 0 : index
    %c0_7 = arith.constant 0 : index
    %8 = vector.load %arg5[%c0_6, %c0_7] : memref<128x128xf32, #tpu.memory_space<vmem>>, vector<128x128xf32>
    tpu.vector_store %arg5[%c0_6, %c0_7], %7 {strides = array<i32>} : memref<128x128xf32, #tpu.memory_space<vmem>>, vector<128x128xf32>,
    %c0_i32_8 = arith.constant 0 : i32
    %9 = arith.cmpi eq, %arg1, %c0_i32_8 : i32
    %10 = arith.extui %9 : i1 to i32
    %c0_i32_9 = arith.constant 0 : i32
    %11 = arith.cmpi ne, %10, %c0_i32_9 : i32
    scf.if %11 {
      %c0_10 = arith.constant 0 : index
      %c0_11 = arith.constant 0 : index
      %12 = vector.load %arg5[%c0_10, %c0_11] : memref<128x128xf32, #tpu.memory_space<vmem>>, vector<128x128xf32>
      %c0_12 = arith.constant 0 : index
      %c0_13 = arith.constant 0 : index
      %13 = vector.load %arg4[%c0_12, %c0_13] : memref<128x128xf32, #tpu.memory_space<vmem>>, vector<128x128xf32>
      tpu.vector_store %arg4[%c0_12, %c0_13], %12 {strides = array<i32>} : memref<128x128xf32, #tpu.memory_space<vmem>>, vector<128x128xf32>,
    } else {
    }
    return
  }
  func.func @transform_0(%arg0: i32, %arg1: i32) -> (i32, i32) {
    %c0_i32 = arith.constant 0 : i32
    return %arg0, %arg1 : i32, i32
  }
  func.func @transform_1(%arg0: i32, %arg1: i32) -> (i32, i32) {
    %c0_i32 = arith.constant 0 : i32
    %c0_i32_0 = arith.constant 0 : i32
    return %arg1, %c0_i32 : i32, i32
  }
  func.func @transform_2(%arg0: i32, %arg1: i32) -> (i32, i32) {
    %c0_i32 = arith.constant 0 : i32
    %c0_i32_0 = arith.constant 0 : i32
    return %arg0, %c0_i32 : i32, i32
  }
}

</mosaic_0001>

<llo_original>
// kernel: tpu_custom_call.1
$region0: #{tpu_custom_call.1}
  #allocation0 [shape = 'u32[]', space=smem, size = 0x4, offset = 0x4, fixed_abs, tag = 'smem constant byte address 0x4 - core index']
  #allocation1 [shape = 'u32[144,128]{1,0:T(1,128)}', space=vmem, size = 0x12000, scoped, tag = 'internal scratch']
  #allocation2 [shape = 'f32[128,128]{1,0:T(8,128)}', space=vmem, size = 0x10000, scoped, tag = 'scratch operand']
  %s0 = inlined_call_operand.hbm [shape: f32[256,128], index: 0, kind: input, shape index: {}]
  %s1 = inlined_call_operand.hbm [shape: f32[128,128], index: 1, kind: input, shape index: {}]
  %s2 = inlined_call_operand.hbm [shape: f32[256,128], index: 2, kind: output, shape index: {}]
  %s3 = sld [smem:[#allocation0]]
  $region57: #{tpu_custom_call.1} parent=0
    _
  %s5 = ssub.s32 1, %s3
  %s6 = scalar_select 0, %s5, %s3
  $region1: #{tpu_custom_call.1} parent=0
    #allocation3 [shape = 'u8[131072]{0}', space=vmem, size = 0x20000, scoped, tag = 'input window, operand 0']
    #allocation4 [shape = 's32[2]{0}', space=sflag, size = 0x8, scoped, tag = 'scoped memory for tpu_custom_call.1']
    #allocation5 [shape = 's32[2]{0}', space=sflag, size = 0x8, scoped, tag = 'scoped memory for tpu_custom_call.1']
    #allocation6 [shape = 'u8[65536]{0}', space=vmem, size = 0x10000, scoped, tag = 'input window, operand 1, single buffered']
    #allocation7 [shape = 's32[1]{0}', space=sflag, size = 0x4, scoped, tag = 'scoped memory for tpu_custom_call.1']
    #allocation8 [shape = 'u8[131072]{0}', space=vmem, size = 0x20000, scoped, tag = 'output window, operand 0']
    %7 = vsyncpa [#allocation4], 0
    %s8 = scalar_lea.sflag [#allocation4], 1
    %9 = vsyncpa %s8, 0
    %10 = vsyncpa [#allocation7], 0
    %11 = vsyncpa [#allocation5], 0
    %s12 = scalar_lea.sflag [#allocation5], 1
    %13 = vsyncpa %s12, 0
    loop: start=0, step=1, limit=4
    $region2: #{tpu_custom_call.1} parent=1 // loop_pre_header
      _
    $region3: #{tpu_custom_call.1} parent=1 // loop_header
      %s15 = sphi 0, %s19
      %p16 = scmp.ge.s32.totalorder %s15, 4
      %s22 = sphi 0, %s34
      %s23 = sphi 0, %s30
      %s24 = sphi 0, %s22
      %s25 = sphi 0, %s23
      %s26 = sphi 0, %s24
      %s27 = sphi 0, %s25
      %s39 = sphi 0, %s41
      %s42 = sphi 0, %s39
      %s43 = sphi 0, %s42
      %s59 = sphi 0, %s43
      %s65 = sphi 0, %s67
      %s68 = sphi 0, %s65
      %s69 = sphi 0, %s68
      %s85 = sphi 0, %s69
      %s91 = sphi 0, %s93
      %s94 = sphi 0, %s91
      %s95 = sphi 0, %s94
      %s111 = sphi 0, %s95
    $region4: #{tpu_custom_call.1} parent=1 // loop_header_branch
      %18 = sbr.rel (%p16) target = $region8
    $region5: #{tpu_custom_call.1} parent=1 // loop_body
      %s20 = ssub.s32 %s15, 1
      %s21 = ssub.s32 %s15, 2
      %s28 = sadd.s32 1, %s23
      %p29 = scmp.ge.s32.totalorder %s28, 1
      %s30 = scalar_select %p29, 0, %s28
      %s31 = sadd.s32 1, %s22
      %s32 = scalar_select %p29, %s31, %s22
      %p33 = scmp.ge.s32.totalorder %s32, 2
      %s34 = scalar_select %p33, 0, %s32
      %s35 = ssub.s32 %s22, %s34
      %s36 = ssub.s32 %s23, %s30
      %s37 = sor.u32 %s35, %s36
      %p38 = scmp.eq.s32.totalorder %s37, 0
      %s40 = sadd.s32 %s39, 1
      %s41 = scalar_select %p38, %s39, %s40
      %p44 = pneg %p38
      %p45 = scmp.eq.s32.totalorder %s15, 1
      %p46 = por %p44, %p45
      %p47 = scmp.ne.s32.totalorder %s39, %s42
      %p48 = scmp.eq.s32.totalorder %s15, 0
      %p49 = por %p47, %p48
      %p50 = scmp.ne.s32.totalorder %s39, %s42
      %p51 = scmp.eq.s32.totalorder %s20, 1
      %p52 = por %p50, %p51
      %p53 = scmp.ne.s32.totalorder %s42, %s43
      %p54 = scmp.eq.s32.totalorder %s20, 0
      %p55 = por %p53, %p54
      %p56 = scmp.ne.s32.totalorder %s42, %s43
      %p57 = scmp.eq.s32.totalorder %s21, 1
      %p58 = por %p56, %p57
      %p60 = scmp.ne.s32.totalorder %s43, %s59
      %p61 = scmp.eq.s32.totalorder %s21, 0
      %p62 = por %p60, %p61
      %s63 = ssub.s32 %s23, %s30
      %p64 = scmp.eq.s32.totalorder %s63, 0
      %s66 = sadd.s32 %s65, 1
      %s67 = scalar_select %p64, %s65, %s66
      %p70 = pneg %p64
      %p71 = scmp.eq.s32.totalorder %s15, 1
      %p72 = por %p70, %p71
      %p73 = scmp.ne.s32.totalorder %s65, %s68
      %p74 = scmp.eq.s32.totalorder %s15, 0
      %p75 = por %p73, %p74
      %p76 = scmp.ne.s32.totalorder %s65, %s68
      %p77 = scmp.eq.s32.totalorder %s20, 1
      %p78 = por %p76, %p77
      %p79 = scmp.ne.s32.totalorder %s68, %s69
      %p80 = scmp.eq.s32.totalorder %s20, 0
      %p81 = por %p79, %p80
      %p82 = scmp.ne.s32.totalorder %s68, %s69
      %p83 = scmp.eq.s32.totalorder %s21, 1
      %p84 = por %p82, %p83
      %p86 = scmp.ne.s32.totalorder %s69, %s85
      %p87 = scmp.eq.s32.totalorder %s21, 0
      %p88 = por %p86, %p87
      %s89 = ssub.s32 %s22, %s34
      %p90 = scmp.eq.s32.totalorder %s89, 0
      %s92 = sadd.s32 %s91, 1
      %s93 = scalar_select %p90, %s91, %s92
      %p96 = pneg %p90
      %p97 = scmp.eq.s32.totalorder %s15, 1
      %p98 = por %p96, %p97
      %p99 = scmp.ne.s32.totalorder %s91, %s94
      %p100 = scmp.eq.s32.totalorder %s15, 0
      %p101 = por %p99, %p100
      %p102 = scmp.ne.s32.totalorder %s91, %s94
      %p103 = scmp.eq.s32.totalorder %s20, 1
      %p104 = por %p102, %p103
      %p105 = scmp.ne.s32.totalorder %s94, %s95
      %p106 = scmp.eq.s32.totalorder %s20, 0
      %p107 = por %p105, %p106
      %p108 = scmp.ne.s32.totalorder %s94, %s95
      %p109 = scmp.eq.s32.totalorder %s21, 1
      %p110 = por %p108, %p109
      %p112 = scmp.ne.s32.totalorder %s95, %s111
      %p113 = scmp.eq.s32.totalorder %s21, 0
      %p114 = por %p112, %p113
      %p115 = scmp.le.s32.totalorder 1, %s15
      %p116 = scmp.lt.s32.totalorder %s15, 3
      %p117 = pnand %p115, %p116
      %p118 = pneg %p117
      // Predicated region
      $region9: #{tpu_custom_call.1} parent=5 // pred_check
        _
      $region10: #{tpu_custom_call.1} parent=5 // pred_check_branch
        %120 = sbr.rel (%p117) target = $region12
      $region11: #{tpu_custom_call.1} parent=5 // pred_region
        %s121 = ssub.s32 %s15, 1
        // Predicated region
        $region13: #{tpu_custom_call.1} parent=11 // pred_check
          %p122 = pneg %p81
        $region14: #{tpu_custom_call.1} parent=11 // pred_check_branch
          %124 = sbr.rel (%p122) target = $region16
        $region15: #{tpu_custom_call.1} parent=11 // pred_region
          %s125 = smul.u32 16, %s25
          %s127 = ssub.s32 2048, 2048
          %128 = vsyncadd [#allocation7], %s127
          %s129 = smul.addr %s125, 128
          %s130 = scalar_lea.hbm %s1, %s129
          %s131 = sshll.u32 [#allocation6], 4
          %s132 = int_to_ptr.vmem [resolvable:$true] %s131
          %137 = dma.hbm_to_vmem [thread:$0]  %s130, 2048, %s132, [#allocation7], 128, 128, 8
        $region16: #{tpu_custom_call.1} parent=11 // pred_fallthru
          _
      $region12: #{tpu_custom_call.1} parent=5 // pred_fallthru
        _
      %p138 = scmp.lt.s32.totalorder %s15, 2
      // Predicated region
      $region17: #{tpu_custom_call.1} parent=5 // pred_check
        %p139 = pneg %p138
      $region18: #{tpu_custom_call.1} parent=5 // pred_check_branch
        %141 = sbr.rel (%p139) target = $region20
      $region19: #{tpu_custom_call.1} parent=5 // pred_region
        // Predicated region
        $region21: #{tpu_custom_call.1} parent=19 // pred_check
          %p142 = pneg %p49
        $region22: #{tpu_custom_call.1} parent=19 // pred_check_branch
          %144 = sbr.rel (%p142) target = $region24
        $region23: #{tpu_custom_call.1} parent=19 // pred_region
          %s145 = sand.u32 %s39, 1
          %s146 = scalar_lea.sflag [#allocation4], %s145
          %s147 = sand.u32 %s39, 1
          %s148 = smul.addr %s147, 128
          %s149 = scalar_lea.vmem [#allocation3], %s148
          %s150 = smul.u32 16, %s22
          %s152 = ssub.s32 2048, 2048
          %153 = vsyncadd %s146, %s152
          %s154 = sadd.s32 %s23, %s150
          %s155 = smul.addr %s154, 128
          %s156 = scalar_lea.hbm %s0, %s155
          %s157 = sshll.u32 %s149, 4
          %s158 = int_to_ptr.vmem [resolvable:$true] %s157
          %163 = dma.hbm_to_vmem [thread:$0]  %s156, 2048, %s158, %s146, 128, 128, 8
        $region24: #{tpu_custom_call.1} parent=19 // pred_fallthru
          _
      $region20: #{tpu_custom_call.1} parent=5 // pred_fallthru
        _
      %p164 = scmp.le.s32.totalorder 1, %s15
      %p165 = scmp.lt.s32.totalorder %s15, 3
      %p166 = pnand %p164, %p165
      %p167 = pneg %p166
      // Predicated region
      $region25: #{tpu_custom_call.1} parent=5 // pred_check
        _
      $region26: #{tpu_custom_call.1} parent=5 // pred_check_branch
        %169 = sbr.rel (%p166) target = $region28
      $region27: #{tpu_custom_call.1} parent=5 // pred_region
        %s170 = ssub.s32 %s15, 1
        %s171 = sand.u32 %s42, 1
        %s172 = scalar_lea.sflag [#allocation4], %s171
        %s173 = sand.u32 %s42, 1
        %s174 = smul.addr %s173, 128
        %s175 = scalar_lea.vmem [#allocation3], %s174
        // Predicated region
        $region29: #{tpu_custom_call.1} parent=27 // pred_check
          %p176 = pneg %p55
        $region30: #{tpu_custom_call.1} parent=27 // pred_check_branch
          %178 = sbr.rel (%p176) target = $region32
        $region31: #{tpu_custom_call.1} parent=27 // pred_region
          %179 = dma.done %s172, 2048
        $region32: #{tpu_custom_call.1} parent=27 // pred_fallthru
          _
        // Predicated region
        $region33: #{tpu_custom_call.1} parent=27 // pred_check
          %p180 = pneg %p81
        $region34: #{tpu_custom_call.1} parent=27 // pred_check_branch
          %182 = sbr.rel (%p180) target = $region36
        $region35: #{tpu_custom_call.1} parent=27 // pred_region
          %183 = dma.done [#allocation7], 2048
        $region36: #{tpu_custom_call.1} parent=27 // pred_fallthru
          _
        %s184 = sand.u32 %s42, 1
        %s185 = scalar_lea.sflag [#allocation4], %s184
        %s186 = sand.u32 %s42, 1
        %s187 = smul.addr %s186, 128
        %s188 = scalar_lea.vmem [#allocation3], %s187
        %p189 = pneg %p55
        %p190 = pneg %p52
        %p191 = pneg %p81
        %p192 = pneg %p78
        %p193 = pneg %p107
        %p194 = pneg %p104
        %s195 = sand.u32 %s94, 1
        %s196 = scalar_lea.sflag [#allocation5], %s195
        %s197 = sand.u32 %s94, 1
        %s198 = smul.addr %s197, 128
        %s199 = scalar_lea.vmem [#allocation8], %s198
        %s200 = smul.u32 16, %s24
        %s201 = smul.u32 16, %s25
        %s202 = smul.u32 16, %s24
        %p203 = scmp.eq.s32.totalorder %s25, 0
        // Predicated region
        $region37: #{tpu_custom_call.1} parent=27 // pred_check
          %p204 = pneg %p203
        $region38: #{tpu_custom_call.1} parent=27 // pred_check_branch
          %206 = sbr.rel (%p204) target = $region40
        $region39: #{tpu_custom_call.1} parent=27 // pred_region
          %207 = vst [vmem:[#allocation2] sm:$0xff] 0.0
          %208 = vst [vmem:[#allocation2 + $0x8] sm:$0xff] 0.0
          %209 = vst [vmem:[#allocation2 + $0x10] sm:$0xff] 0.0
          %210 = vst [vmem:[#allocation2 + $0x18] sm:$0xff] 0.0
          %211 = vst [vmem:[#allocation2 + $0x20] sm:$0xff] 0.0
          %212 = vst [vmem:[#allocation2 + $0x28] sm:$0xff] 0.0
          %213 = vst [vmem:[#allocation2 + $0x30] sm:$0xff] 0.0
          %214 = vst [vmem:[#allocation2 + $0x38] sm:$0xff] 0.0
          %215 = vst [vmem:[#allocation2 + $0x40] sm:$0xff] 0.0
          %216 = vst [vmem:[#allocation2 + $0x48] sm:$0xff] 0.0
          %217 = vst [vmem:[#allocation2 + $0x50] sm:$0xff] 0.0
          %218 = vst [vmem:[#allocation2 + $0x58] sm:$0xff] 0.0
          %219 = vst [vmem:[#allocation2 + $0x60] sm:$0xff] 0.0
          %220 = vst [vmem:[#allocation2 + $0x68] sm:$0xff] 0.0
          %221 = vst [vmem:[#allocation2 + $0x70] sm:$0xff] 0.0
          %222 = vst [vmem:[#allocation2 + $0x78] sm:$0xff] 0.0
        $region40: #{tpu_custom_call.1} parent=27 // pred_fallthru
          _
        %v223 = vld [vmem:[#allocation2] sm:$0xff]
        %v224 = vld [vmem:[#allocation2 + $0x8] sm:$0xff]
        %v225 = vld [vmem:[#allocation2 + $0x10] sm:$0xff]
        %v226 = vld [vmem:[#allocation2 + $0x18] sm:$0xff]
        %v227 = vld [vmem:[#allocation2 + $0x20] sm:$0xff]
        %v228 = vld [vmem:[#allocation2 + $0x28] sm:$0xff]
        %v229 = vld [vmem:[#allocation2 + $0x30] sm:$0xff]
        %v230 = vld [vmem:[#allocation2 + $0x38] sm:$0xff]
        %v231 = vld [vmem:[#allocation2 + $0x40] sm:$0xff]
        %v232 = vld [vmem:[#allocation2 + $0x48] sm:$0xff]
        %v233 = vld [vmem:[#allocation2 + $0x50] sm:$0xff]
        %v234 = vld [vmem:[#allocation2 + $0x58] sm:$0xff]
        %v235 = vld [vmem:[#allocation2 + $0x60] sm:$0xff]
        %v236 = vld [vmem:[#allocation2 + $0x68] sm:$0xff]
        %v237 = vld [vmem:[#allocation2 + $0x70] sm:$0xff]
        %v238 = vld [vmem:[#allocation2 + $0x78] sm:$0xff]
        %v239 = vld [vmem:[%s175] sm:$0xff]
        %v240 = vld [vmem:[%s175 + $0x8] sm:$0xff]
        %v241 = vld [vmem:[%s175 + $0x10] sm:$0xff]
        %v242 = vld [vmem:[%s175 + $0x18] sm:$0xff]
        %v243 = vld [vmem:[%s175 + $0x20] sm:$0xff]
        %v244 = vld [vmem:[%s175 + $0x28] sm:$0xff]
        %v245 = vld [vmem:[%s175 + $0x30] sm:$0xff]
        %v246 = vld [vmem:[%s175 + $0x38] sm:$0xff]
        %v247 = vld [vmem:[%s175 + $0x40] sm:$0xff]
        %v248 = vld [vmem:[%s175 + $0x48] sm:$0xff]
        %v249 = vld [vmem:[%s175 + $0x50] sm:$0xff]
        %v250 = vld [vmem:[%s175 + $0x58] sm:$0xff]
        %v251 = vld [vmem:[%s175 + $0x60] sm:$0xff]
        %v252 = vld [vmem:[%s175 + $0x68] sm:$0xff]
        %v253 = vld [vmem:[%s175 + $0x70] sm:$0xff]
        %v254 = vld [vmem:[%s175 + $0x78] sm:$0xff]
        %v255 = vld [vmem:[#allocation6] sm:$0xff]
        %v256 = vld [vmem:[#allocation6 + $0x8] sm:$0xff]
        %v257 = vld [vmem:[#allocation6 + $0x10] sm:$0xff]
        %v258 = vld [vmem:[#allocation6 + $0x18] sm:$0xff]
        %v259 = vld [vmem:[#allocation6 + $0x20] sm:$0xff]
        %v260 = vld [vmem:[#allocation6 + $0x28] sm:$0xff]
        %v261 = vld [vmem:[#allocation6 + $0x30] sm:$0xff]
        %v262 = vld [vmem:[#allocation6 + $0x38] sm:$0xff]
        %v263 = vld [vmem:[#allocation6 + $0x40] sm:$0xff]
        %v264 = vld [vmem:[#allocation6 + $0x48] sm:$0xff]
        %v265 = vld [vmem:[#allocation6 + $0x50] sm:$0xff]
        %v266 = vld [vmem:[#allocation6 + $0x58] sm:$0xff]
        %v267 = vld [vmem:[#allocation6 + $0x60] sm:$0xff]
        %v268 = vld [vmem:[#allocation6 + $0x68] sm:$0xff]
        %v269 = vld [vmem:[#allocation6 + $0x70] sm:$0xff]
        %v270 = vld [vmem:[#allocation6 + $0x78] sm:$0xff]
        %271 = vmatprep.subr.mxu0 0.0
        %272 = vmatpush1.msra.mxu0 %v255
        %273 = vmatprep.subr.mxu0 0.0
        %274 = vmatpush1.msra.mxu0 %v256
        %275 = vmatprep.subr.mxu0 0.0
        %276 = vmatpush1.msra.mxu0 %v257
        %277 = vmatprep.subr.mxu0 0.0
        %278 = vmatpush1.msra.mxu0 %v258
        %279 = vmatprep.subr.mxu0 0.0
        %280 = vmatpush1.msra.mxu0 %v259
        %281 = vmatprep.subr.mxu0 0.0
        %282 = vmatpush1.msra.mxu0 %v260
        %283 = vmatprep.subr.mxu0 0.0
        %284 = vmatpush1.msra.mxu0 %v261
        %285 = vmatprep.subr.mxu0 0.0
        %286 = vmatpush1.msra.mxu0 %v262
        %287 = vmatprep.subr.mxu0 0.0
        %288 = vmatpush1.msra.mxu0 %v263
        %289 = vmatprep.subr.mxu0 0.0
        %290 = vmatpush1.msra.mxu0 %v264
        %291 = vmatprep.subr.mxu0 0.0
        %292 = vmatpush1.msra.mxu0 %v265
        %293 = vmatprep.subr.mxu0 0.0
        %294 = vmatpush1.msra.mxu0 %v266
        %295 = vmatprep.subr.mxu0 0.0
        %296 = vmatpush1.msra.mxu0 %v267
        %297 = vmatprep.subr.mxu0 0.0
        %298 = vmatpush1.msra.mxu0 %v268
        %299 = vmatprep.subr.mxu0 0.0
        %300 = vmatpush1.msra.mxu0 %v269
        %301 = vmatprep.subr.mxu0 0.0
        %302 = vmatpush1.msra.mxu0 %v270
        %303 = vmatprep.subr.mxu0 0.0
        %304 = vmatpush1.msra.mxu0 0.0
        %305 = vmatprep.subr.mxu0 0.0
        %306 = vmatpush1.msra.mxu0 0.0
        %307 = vmatprep.subr.mxu0 0.0
        %308 = vmatpush1.msra.mxu0 0.0
        %309 = vmatprep.subr.mxu0 0.0
        %310 = vmatpush1.msra.mxu0 0.0
        %311 = vmatprep.subr.mxu0 0.0
        %312 = vmatpush1.msra.mxu0 0.0
        %313 = vmatprep.subr.mxu0 0.0
        %314 = vmatpush1.msra.mxu0 0.0
        %315 = vmatprep.subr.mxu0 0.0
        %316 = vmatpush1.msra.mxu0 0.0
        %317 = vmatprep.subr.mxu0 0.0
        %318 = vmatpush1.msra.mxu0 0.0
        %319 = vmatprep.subr.mxu0 0.0
        %320 = vmatpush1.msra.mxu0 0.0
        %321 = vmatprep.subr.mxu0 0.0
        %322 = vmatpush1.msra.mxu0 0.0
        %323 = vmatprep.subr.mxu0 0.0
        %324 = vmatpush1.msra.mxu0 0.0
        %325 = vmatprep.subr.mxu0 0.0
        %326 = vmatpush1.msra.mxu0 0.0
        %327 = vmatprep.subr.mxu0 0.0
        %328 = vmatpush1.msra.mxu0 0.0
        %329 = vmatprep.subr.mxu0 0.0
        %330 = vmatpush1.msra.mxu0 0.0
        %331 = vmatprep.subr.mxu0 0.0
        %332 = vmatpush1.msra.mxu0 0.0
        %333 = vmatprep.subr.mxu0 0.0
        %334 = vmatpush1.msra.mxu0 0.0
        %335 = vmatprep.mubr.f32.mxu0 0.0
        %336 = vmatmul.mubr.f32.gmra.mrb[0].mxu0 %v239
        %v337 = vpop.f32.mrb[0].mxu0
        %v338 = vadd.f32 0.0, %v337
        %v339 = vpop.f32.mrb[0].mxu0
        %340 = vmatprep.mubr.f32.mxu0 0.0
        %341 = vmatmul.mubr.f32.gmra.mrb[0].mxu0 %v240
        %v342 = vpop.f32.mrb[0].mxu0
        %v343 = vadd.f32 0.0, %v342
        %v344 = vpop.f32.mrb[0].mxu0
        %345 = vmatprep.mubr.f32.mxu0 0.0
        %346 = vmatmul.mubr.f32.gmra.mrb[0].mxu0 %v241
        %v347 = vpop.f32.mrb[0].mxu0
        %v348 = vadd.f32 0.0, %v347
        %v349 = vpop.f32.mrb[0].mxu0
        %350 = vmatprep.mubr.f32.mxu0 0.0
        %351 = vmatmul.mubr.f32.gmra.mrb[0].mxu0 %v242
        %v352 = vpop.f32.mrb[0].mxu0
        %v353 = vadd.f32 0.0, %v352
        %v354 = vpop.f32.mrb[0].mxu0
        %355 = vmatprep.mubr.f32.mxu0 0.0
        %356 = vmatmul.mubr.f32.gmra.mrb[0].mxu0 %v243
        %v357 = vpop.f32.mrb[0].mxu0
        %v358 = vadd.f32 0.0, %v357
        %v359 = vpop.f32.mrb[0].mxu0
        %360 = vmatprep.mubr.f32.mxu0 0.0
        %361 = vmatmul.mubr.f32.gmra.mrb[0].mxu0 %v244
        %v362 = vpop.f32.mrb[0].mxu0
        %v363 = vadd.f32 0.0, %v362
        %v364 = vpop.f32.mrb[0].mxu0
        %365 = vmatprep.mubr.f32.mxu0 0.0
        %366 = vmatmul.mubr.f32.gmra.mrb[0].mxu0 %v245
        %v367 = vpop.f32.mrb[0].mxu0
        %v368 = vadd.f32 0.0, %v367
        %v369 = vpop.f32.mrb[0].mxu0
        %370 = vmatprep.mubr.f32.mxu0 0.0
        %371 = vmatmul.mubr.f32.gmra.mrb[0].mxu0 %v246
        %v372 = vpop.f32.mrb[0].mxu0
        %v373 = vadd.f32 0.0, %v372
        %v374 = vpop.f32.mrb[0].mxu0
        %375 = vmatprep.mubr.f32.mxu0 0.0
        %376 = vmatmul.mubr.f32.gmra.mrb[0].mxu0 %v247
        %v377 = vpop.f32.mrb[0].mxu0
        %v378 = vadd.f32 0.0, %v377
        %v379 = vpop.f32.mrb[0].mxu0
        %380 = vmatprep.mubr.f32.mxu0 0.0
        %381 = vmatmul.mubr.f32.gmra.mrb[0].mxu0 %v248
        %v382 = vpop.f32.mrb[0].mxu0
        %v383 = vadd.f32 0.0, %v382
        %v384 = vpop.f32.mrb[0].mxu0
        %385 = vmatprep.mubr.f32.mxu0 0.0
        %386 = vmatmul.mubr.f32.gmra.mrb[0].mxu0 %v249
        %v387 = vpop.f32.mrb[0].mxu0
        %v388 = vadd.f32 0.0, %v387
        %v389 = vpop.f32.mrb[0].mxu0
        %390 = vmatprep.mubr.f32.mxu0 0.0
        %391 = vmatmul.mubr.f32.gmra.mrb[0].mxu0 %v250
        %v392 = vpop.f32.mrb[0].mxu0
        %v393 = vadd.f32 0.0, %v392
        %v394 = vpop.f32.mrb[0].mxu0
        %395 = vmatprep.mubr.f32.mxu0 0.0
        %396 = vmatmul.mubr.f32.gmra.mrb[0].mxu0 %v251
        %v397 = vpop.f32.mrb[0].mxu0
        %v398 = vadd.f32 0.0, %v397
        %v399 = vpop.f32.mrb[0].mxu0
        %400 = vmatprep.mubr.f32.mxu0 0.0
        %401 = vmatmul.mubr.f32.gmra.mrb[0].mxu0 %v252
        %v402 = vpop.f32.mrb[0].mxu0
        %v403 = vadd.f32 0.0, %v402
        %v404 = vpop.f32.mrb[0].mxu0
        %405 = vmatprep.mubr.f32.mxu0 0.0
        %406 = vmatmul.mubr.f32.gmra.mrb[0].mxu0 %v253
        %v407 = vpop.f32.mrb[0].mxu0
        %v408 = vadd.f32 0.0, %v407
        %v409 = vpop.f32.mrb[0].mxu0
        %410 = vmatprep.mubr.f32.mxu0 0.0
        %411 = vmatmul.mubr.f32.gmra.mrb[0].mxu0 %v254
        %v412 = vpop.f32.mrb[0].mxu0
        %v413 = vadd.f32 0.0, %v412
        %v414 = vpop.f32.mrb[0].mxu0
        %415 = vdwg.mxu0
        %v416 = vadd.f32 %v223, %v338
        %v417 = vadd.f32 %v224, %v343
        %v418 = vadd.f32 %v225, %v348
        %v419 = vadd.f32 %v226, %v353
        %v420 = vadd.f32 %v227, %v358
        %v421 = vadd.f32 %v228, %v363
        %v422 = vadd.f32 %v229, %v368
        %v423 = vadd.f32 %v230, %v373
        %v424 = vadd.f32 %v231, %v378
        %v425 = vadd.f32 %v232, %v383
        %v426 = vadd.f32 %v233, %v388
        %v427 = vadd.f32 %v234, %v393
        %v428 = vadd.f32 %v235, %v398
        %v429 = vadd.f32 %v236, %v403
        %v430 = vadd.f32 %v237, %v408
        %v431 = vadd.f32 %v238, %v413
        %432 = vst [vmem:[#allocation2] sm:$0xff] %v416
        %433 = vst [vmem:[#allocation2 + $0x8] sm:$0xff] %v417
        %434 = vst [vmem:[#allocation2 + $0x10] sm:$0xff] %v418
        %435 = vst [vmem:[#allocation2 + $0x18] sm:$0xff] %v419
        %436 = vst [vmem:[#allocation2 + $0x20] sm:$0xff] %v420
        %437 = vst [vmem:[#allocation2 + $0x28] sm:$0xff] %v421
        %438 = vst [vmem:[#allocation2 + $0x30] sm:$0xff] %v422
        %439 = vst [vmem:[#allocation2 + $0x38] sm:$0xff] %v423
        %440 = vst [vmem:[#allocation2 + $0x40] sm:$0xff] %v424
        %441 = vst [vmem:[#allocation2 + $0x48] sm:$0xff] %v425
        %442 = vst [vmem:[#allocation2 + $0x50] sm:$0xff] %v426
        %443 = vst [vmem:[#allocation2 + $0x58] sm:$0xff] %v427
        %444 = vst [vmem:[#allocation2 + $0x60] sm:$0xff] %v428
        %445 = vst [vmem:[#allocation2 + $0x68] sm:$0xff] %v429
        %446 = vst [vmem:[#allocation2 + $0x70] sm:$0xff] %v430
        %447 = vst [vmem:[#allocation2 + $0x78] sm:$0xff] %v431
        // Predicated region
        $region41: #{tpu_custom_call.1} parent=27 // pred_check
          %p448 = pneg %p203
        $region42: #{tpu_custom_call.1} parent=27 // pred_check_branch
          %450 = sbr.rel (%p448) target = $region44
        $region43: #{tpu_custom_call.1} parent=27 // pred_region
          %v451 = vld [vmem:[#allocation2] sm:$0xff]
          %v452 = vld [vmem:[#allocation2 + $0x8] sm:$0xff]
          %v453 = vld [vmem:[#allocation2 + $0x10] sm:$0xff]
          %v454 = vld [vmem:[#allocation2 + $0x18] sm:$0xff]
          %v455 = vld [vmem:[#allocation2 + $0x20] sm:$0xff]
          %v456 = vld [vmem:[#allocation2 + $0x28] sm:$0xff]
          %v457 = vld [vmem:[#allocation2 + $0x30] sm:$0xff]
          %v458 = vld [vmem:[#allocation2 + $0x38] sm:$0xff]
          %v459 = vld [vmem:[#allocation2 + $0x40] sm:$0xff]
          %v460 = vld [vmem:[#allocation2 + $0x48] sm:$0xff]
          %v461 = vld [vmem:[#allocation2 + $0x50] sm:$0xff]
          %v462 = vld [vmem:[#allocation2 + $0x58] sm:$0xff]
          %v463 = vld [vmem:[#allocation2 + $0x60] sm:$0xff]
          %v464 = vld [vmem:[#allocation2 + $0x68] sm:$0xff]
          %v465 = vld [vmem:[#allocation2 + $0x70] sm:$0xff]
          %v466 = vld [vmem:[#allocation2 + $0x78] sm:$0xff]
          %467 = vst [vmem:[%s199] sm:$0xff] %v451
          %468 = vst [vmem:[%s199 + $0x8] sm:$0xff] %v452
          %469 = vst [vmem:[%s199 + $0x10] sm:$0xff] %v453
          %470 = vst [vmem:[%s199 + $0x18] sm:$0xff] %v454
          %471 = vst [vmem:[%s199 + $0x20] sm:$0xff] %v455
          %472 = vst [vmem:[%s199 + $0x28] sm:$0xff] %v456
          %473 = vst [vmem:[%s199 + $0x30] sm:$0xff] %v457
          %474 = vst [vmem:[%s199 + $0x38] sm:$0xff] %v458
          %475 = vst [vmem:[%s199 + $0x40] sm:$0xff] %v459
          %476 = vst [vmem:[%s199 + $0x48] sm:$0xff] %v460
          %477 = vst [vmem:[%s199 + $0x50] sm:$0xff] %v461
          %478 = vst [vmem:[%s199 + $0x58] sm:$0xff] %v462
          %479 = vst [vmem:[%s199 + $0x60] sm:$0xff] %v463
          %480 = vst [vmem:[%s199 + $0x68] sm:$0xff] %v464
          %481 = vst [vmem:[%s199 + $0x70] sm:$0xff] %v465
          %482 = vst [vmem:[%s199 + $0x78] sm:$0xff] %v466
        $region44: #{tpu_custom_call.1} parent=27 // pred_fallthru
          _
        %s483 = sand.u32 %s94, 1
        %s484 = scalar_lea.sflag [#allocation5], %s483
        %s485 = sand.u32 %s94, 1
        %s486 = smul.addr %s485, 128
        %s487 = scalar_lea.vmem [#allocation8], %s486
        // Predicated region
        $region45: #{tpu_custom_call.1} parent=27 // pred_check
          %p488 = pneg %p104
        $region46: #{tpu_custom_call.1} parent=27 // pred_check_branch
          %490 = sbr.rel (%p488) target = $region48
        $region47: #{tpu_custom_call.1} parent=27 // pred_region
          %s491 = smul.u32 16, %s24
          %s493 = ssub.s32 2048, 2048
          %494 = vsyncadd %s484, %s493
          %s495 = smul.addr %s491, 128
          %s496 = scalar_lea.hbm %s2, %s495
          %s497 = sshll.u32 %s487, 4
          %s498 = int_to_ptr.vmem [resolvable:$true] %s497
          %503 = dma.vmem_to_hbm [thread:$0]  %s498, 2048, %s496, %s484, 128, 128, 8
        $region48: #{tpu_custom_call.1} parent=27 // pred_fallthru
          _
      $region28: #{tpu_custom_call.1} parent=5 // pred_fallthru
        _
      %p504 = scmp.le.s32.totalorder 2, %s15
      // Predicated region
      $region49: #{tpu_custom_call.1} parent=5 // pred_check
        %p505 = pneg %p504
      $region50: #{tpu_custom_call.1} parent=5 // pred_check_branch
        %507 = sbr.rel (%p505) target = $region52
      $region51: #{tpu_custom_call.1} parent=5 // pred_region
        %s508 = ssub.s32 %s15, 2
        // Predicated region
        $region53: #{tpu_custom_call.1} parent=51 // pred_check
          %p509 = pneg %p110
        $region54: #{tpu_custom_call.1} parent=51 // pred_check_branch
          %511 = sbr.rel (%p509) target = $region56
        $region55: #{tpu_custom_call.1} parent=51 // pred_region
          %s512 = sand.u32 %s95, 1
          %s513 = scalar_lea.sflag [#allocation5], %s512
          %s514 = sand.u32 %s95, 1
          %s515 = smul.addr %s514, 128
          %s516 = scalar_lea.vmem [#allocation8], %s515
          %517 = dma.done %s513, 2048
        $region56: #{tpu_custom_call.1} parent=51 // pred_fallthru
          _
      $region52: #{tpu_custom_call.1} parent=5 // pred_fallthru
        _
    $region6: #{tpu_custom_call.1} parent=1 // loop_footer
      %s19 = sadd.s32 1, %s15
    $region7: #{tpu_custom_call.1} parent=1 // loop_footer_branch
      %14 = sbr.rel target = $region3
    $region8: #{tpu_custom_call.1} parent=1 // loop_exit
      _
    %518 = vsyncpa [#allocation4], 1
    %s519 = scalar_lea.sflag [#allocation4], 1
    %520 = vsyncpa %s519, 1
    %521 = vsyncpa [#allocation7], 1
    %522 = vsyncpa [#allocation5], 1
    %s523 = scalar_lea.sflag [#allocation5], 1
    %524 = vsyncpa %s523, 1

</llo_original>
